<compile_context>
chip_gen: v7x
topology: tpu7x:2x2x1
jax: 0.10.0
libtpu: 0.0.40
codegen_flags: <defaults>
</compile_context>

<pallas_src>
import functools

import jax
import jax.numpy as jnp
from jax.experimental import pallas as pl
from jax.experimental.pallas import tpu as pltpu

LN_EPS = 1e-5


def _round_up(a, b):
    return (a + b - 1) // b * b


def prenorm_kernel(x_ref, gamma_ref, beta_ref, wt_ref, b_ref, o_ref, xn_ref,
                   *, d_orig):
    # x_ref:     (tm, Dp)   tile of input rows (Dp = D padded to mult of 128)
    # gamma/beta:(1, Dp)    LayerNorm affine params (zero-padded)
    # wt_ref:    (Dp, tn)   pre-transposed Linear weight slab, bf16
    # b_ref:     (1, tn)    Linear bias slab
    # o_ref:     (tm, tn)   output tile
    # xn_ref:    (tm, Dp)   bf16 scratch holding LN(x) for the current row tile
    j = pl.program_id(1)

    # LayerNorm only once per row tile (j == 0); reused across all column tiles.
    @pl.when(j == 0)
    def _():
        x = x_ref[...].astype(jnp.float32)
        d_pad = x.shape[-1]

        if d_pad != d_orig:
            col = jax.lax.broadcasted_iota(jnp.int32, (1, d_pad), 1)
            mask = (col < d_orig).astype(jnp.float32)
            x = x * mask

        inv_d = 1.0 / d_orig
        mean = jnp.sum(x, axis=-1, keepdims=True) * inv_d
        xc = x - mean
        if d_pad != d_orig:
            xc = xc * mask                   # keep padded lanes out of the var
        var = jnp.sum(xc * xc, axis=-1, keepdims=True) * inv_d
        inv = jax.lax.rsqrt(var + LN_EPS)

        # Fold gamma into the inverse-stddev (gamma/beta padded lanes are 0,
        # so padded lanes of xn stay 0 and never pollute the matmul).
        scale = inv * gamma_ref[...].astype(jnp.float32)
        xn = xc * scale + beta_ref[...].astype(jnp.float32)
        xn_ref[...] = xn.astype(xn_ref.dtype)

    # fn(normed): Linear -> bf16 MXU matmul, f32 accumulation.
    y = jnp.dot(xn_ref[...], wt_ref[...], preferred_element_type=jnp.float32)
    y = y + b_ref[...].astype(jnp.float32)
    o_ref[...] = y.astype(o_ref.dtype)


def prenorm_linear(x, gamma, beta, w, b, *, tm=256, tn=512):
    B, N, D = x.shape
    M = B * N
    Dp = _round_up(D, 128)

    # Row tile: large (MXU-friendly), 128-aligned, never bigger than the padded
    # row count.  Column tile keeps the (Dp, Dp) weight from having to be fully
    # resident in VMEM (v7x 64 MiB budget).
    tm_eff = min(tm, _round_up(M, 128))
    tn_eff = min(tn, Dp)
    M_pad = _round_up(M, tm_eff)

    x2 = jnp.pad(x.reshape(M, D), ((0, M_pad - M), (0, Dp - D)))
    gamma2 = jnp.pad(gamma.reshape(1, D), ((0, 0), (0, Dp - D)))
    beta2 = jnp.pad(beta.reshape(1, D), ((0, 0), (0, Dp - D)))
    b2 = jnp.pad(b.reshape(1, D), ((0, 0), (0, Dp - D)))
    # Pre-transpose W once in the wrapper (PyTorch layout is (out, in)) and
    # store it in bf16 for the MXU.
    wT = jnp.pad(w.T, ((0, Dp - D), (0, Dp - D))).astype(jnp.bfloat16)

    kernel = functools.partial(prenorm_kernel, d_orig=D)

    out = pl.pallas_call(
        kernel,
        out_shape=jax.ShapeDtypeStruct((M_pad, Dp), x.dtype),
        grid_spec=pltpu.PrefetchScalarGridSpec(
            num_scalar_prefetch=0,
            grid=(M_pad // tm_eff, Dp // tn_eff),
            in_specs=[
                pl.BlockSpec((tm_eff, Dp), lambda i, j: (i, 0)),   # x row tile
                pl.BlockSpec((1, Dp), lambda i, j: (0, 0)),        # gamma
                pl.BlockSpec((1, Dp), lambda i, j: (0, 0)),        # beta
                pl.BlockSpec((Dp, tn_eff), lambda i, j: (0, j)),   # W^T slab
                pl.BlockSpec((1, tn_eff), lambda i, j: (0, j)),    # bias slab
            ],
            out_specs=pl.BlockSpec((tm_eff, tn_eff), lambda i, j: (i, j)),
            scratch_shapes=[pltpu.VMEM((tm_eff, Dp), jnp.bfloat16)],
        ),
        compiler_params=pltpu.CompilerParams(
            # Column axis is "arbitrary": the xn scratch computed at j == 0 is
            # reused for j > 0, so it must stay on one core and run in order.
            dimension_semantics=("parallel", "arbitrary"),
            vmem_limit_bytes=48 * 1024 * 1024,
        ),
    )(x2, gamma2, beta2, wT, b2)

    return out[:M, :D].reshape(B, N, D)


def prenorm_reference(x, gamma, beta, w, b):
    xf = x.astype(jnp.float32)
    mean = jnp.mean(xf, axis=-1, keepdims=True)
    var = jnp.mean((xf - mean) ** 2, axis=-1, keepdims=True)
    xn = (xf - mean) * jax.lax.rsqrt(var + LN_EPS) * gamma + beta
    return (xn @ w.T + b).astype(x.dtype)


if __name__ == "__main__":
    key = jax.random.PRNGKey(0)
    B, N, D = 2, 8, 32
    k1, k2, k3 = jax.random.split(key, 3)

    x = jax.random.normal(k1, (B, N, D), dtype=jnp.float32)
    # LayerNorm defaults (gamma=1, beta=0) plus a small Linear as `fn`.
    gamma = jnp.ones((D,), dtype=jnp.float32)
    beta = jnp.zeros((D,), dtype=jnp.float32)
    w = jax.random.normal(k2, (D, D), dtype=jnp.float32) * 0.02
    b = jax.random.normal(k3, (D,), dtype=jnp.float32) * 0.01

    out = prenorm_linear(x, gamma, beta, w, b)
    out = jax.block_until_ready(out)

    ref = prenorm_reference(x, gamma, beta, w, b)
    assert out.shape == (B, N, D)
    # Matmul operands are bf16 (f32 accumulate), so compare at bf16-level tol.
    assert jnp.max(jnp.abs(out - ref)) < 1e-2

    print("KERNEL_OK")
</pallas_src>

<mosaic_0001>
module attributes {stable_mosaic.version = 11 : i64} {
  func.func @prenorm_kernel(%arg0: i32, %arg1: i32, %arg2: memref<128x128xf32, #tpu.memory_space<vmem>>, %arg3: memref<1x128xf32, #tpu.memory_space<vmem>>, %arg4: memref<1x128xf32, #tpu.memory_space<vmem>>, %arg5: memref<128x128xbf16, #tpu.memory_space<vmem>>, %arg6: memref<1x128xf32, #tpu.memory_space<vmem>>, %arg7: memref<128x128xf32, #tpu.memory_space<vmem>>, %arg8: memref<128x128xbf16, #tpu.memory_space<vmem>>) attributes {dimension_semantics = [#tpu.dimension_semantics<parallel>, #tpu.dimension_semantics<arbitrary>], iteration_bounds = array<i64: 1, 1>, scalar_prefetch = 0 : i64, scratch_operands = 1 : i64, tpu.core_type = #tpu.core_type<tc>, window_params = [{transform_indices = @transform_0, window_bounds = array<i64: 128, 128>}, {pipeline_mode = #tpu.pipeline_mode<synchronous>, transform_indices = @transform_1, window_bounds = array<i64: 1, 128>}, {pipeline_mode = #tpu.pipeline_mode<synchronous>, transform_indices = @transform_2, window_bounds = array<i64: 1, 128>}, {transform_indices = @transform_3, window_bounds = array<i64: 128, 128>}, {transform_indices = @transform_4, window_bounds = array<i64: 1, 128>}, {transform_indices = @transform_5, window_bounds = array<i64: 128, 128>}]} {
    %c0_i32 = arith.constant 0 : i32
    %0 = arith.cmpi eq, %arg1, %c0_i32 : i32
    %1 = arith.extui %0 : i1 to i32
    %c0_i32_0 = arith.constant 0 : i32
    %2 = arith.cmpi ne, %1, %c0_i32_0 : i32
    scf.if %2 {
      %c0_8 = arith.constant 0 : index
      %c0_9 = arith.constant 0 : index
      %10 = vector.load %arg2[%c0_8, %c0_9] : memref<128x128xf32, #tpu.memory_space<vmem>>, vector<128x128xf32>
      %11 = tpu.iota {dimensions = array<i32: 1>} : vector<1x128xi32>
      %c32_i32 = arith.constant 32 : i32
      %12 = vector.broadcast %c32_i32 : i32 to vector<1x128xi32>
      %13 = arith.cmpi slt, %11, %12 : vector<1x128xi32>
      %14 = arith.extui %13 : vector<1x128xi1> to vector<1x128xi32>
      %15 = arith.sitofp %14 : vector<1x128xi32> to vector<1x128xf32>
      %16 = vector.broadcast %15 : vector<1x128xf32> to vector<128x128xf32>
      %17 = arith.mulf %10, %16 : vector<128x128xf32>
      %cst_10 = arith.constant dense<0.000000e+00> : vector<128xf32>
      %18 = vector.multi_reduction <add>, %17, %cst_10 [1] : vector<128x128xf32> to vector<128xf32>
      %19 = vector.shape_cast %18 : vector<128xf32> to vector<128x1xf32>
      %cst_11 = arith.constant 3.125000e-02 : f32
      %20 = vector.broadcast %cst_11 : f32 to vector<128x1xf32>
      %21 = arith.mulf %19, %20 : vector<128x1xf32>
      %22 = vector.broadcast %21 : vector<128x1xf32> to vector<128x128xf32>
      %23 = arith.subf %17, %22 : vector<128x128xf32>
      %24 = vector.broadcast %15 : vector<1x128xf32> to vector<128x128xf32>
      %25 = arith.mulf %23, %24 : vector<128x128xf32>
      %26 = arith.mulf %25, %25 : vector<128x128xf32>
      %cst_12 = arith.constant dense<0.000000e+00> : vector<128xf32>
      %27 = vector.multi_reduction <add>, %26, %cst_12 [1] : vector<128x128xf32> to vector<128xf32>
      %28 = vector.shape_cast %27 : vector<128xf32> to vector<128x1xf32>
      %cst_13 = arith.constant 3.125000e-02 : f32
      %29 = vector.broadcast %cst_13 : f32 to vector<128x1xf32>
      %30 = arith.mulf %28, %29 : vector<128x1xf32>
      %cst_14 = arith.constant 9.99999974E-6 : f32
      %31 = vector.broadcast %cst_14 : f32 to vector<128x1xf32>
      %32 = arith.addf %30, %31 : vector<128x1xf32>
      %33 = math.rsqrt %32 : vector<128x1xf32>
      %c0_15 = arith.constant 0 : index
      %c0_16 = arith.constant 0 : index
      %34 = vector.load %arg3[%c0_15, %c0_16] : memref<1x128xf32, #tpu.memory_space<vmem>>, vector<1x128xf32>
      %35 = vector.broadcast %33 : vector<128x1xf32> to vector<128x128xf32>
      %36 = vector.broadcast %34 : vector<1x128xf32> to vector<128x128xf32>
      %37 = arith.mulf %35, %36 : vector<128x128xf32>
      %38 = arith.mulf %25, %37 : vector<128x128xf32>
      %c0_17 = arith.constant 0 : index
      %c0_18 = arith.constant 0 : index
      %39 = vector.load %arg4[%c0_17, %c0_18] : memref<1x128xf32, #tpu.memory_space<vmem>>, vector<1x128xf32>
      %40 = vector.broadcast %39 : vector<1x128xf32> to vector<128x128xf32>
      %41 = arith.addf %38, %40 : vector<128x128xf32>
      %42 = arith.truncf %41 : vector<128x128xf32> to vector<128x128xbf16>
      %c0_19 = arith.constant 0 : index
      %c0_20 = arith.constant 0 : index
      %43 = vector.load %arg8[%c0_19, %c0_20] : memref<128x128xbf16, #tpu.memory_space<vmem>>, vector<128x128xbf16>
      tpu.vector_store %arg8[%c0_19, %c0_20], %42 {strides = array<i32>} : memref<128x128xbf16, #tpu.memory_space<vmem>>, vector<128x128xbf16>,
    } else {
    }
    %c0 = arith.constant 0 : index
    %c0_1 = arith.constant 0 : index
    %3 = vector.load %arg8[%c0, %c0_1] : memref<128x128xbf16, #tpu.memory_space<vmem>>, vector<128x128xbf16>
    %c0_2 = arith.constant 0 : index
    %c0_3 = arith.constant 0 : index
    %4 = vector.load %arg5[%c0_2, %c0_3] : memref<128x128xbf16, #tpu.memory_space<vmem>>, vector<128x128xbf16>
    %cst = arith.constant dense<0.000000e+00> : vector<128x128xf32>
    %5 = tpu.matmul %3, %4, %cst {dimension_numbers = #tpu.dot_dimension_numbers<[1], [0], [0], [1], [0, 0, 1, 1], [], []>} : vector<128x128xbf16>, vector<128x128xbf16>, vector<128x128xf32> -> vector<128x128xf32>
    %c0_4 = arith.constant 0 : index
    %c0_5 = arith.constant 0 : index
    %6 = vector.load %arg6[%c0_4, %c0_5] : memref<1x128xf32, #tpu.memory_space<vmem>>, vector<1x128xf32>
    %7 = vector.broadcast %6 : vector<1x128xf32> to vector<128x128xf32>
    %8 = arith.addf %5, %7 : vector<128x128xf32>
    %c0_6 = arith.constant 0 : index
    %c0_7 = arith.constant 0 : index
    %9 = vector.load %arg7[%c0_6, %c0_7] : memref<128x128xf32, #tpu.memory_space<vmem>>, vector<128x128xf32>
    tpu.vector_store %arg7[%c0_6, %c0_7], %8 {strides = array<i32>} : memref<128x128xf32, #tpu.memory_space<vmem>>, vector<128x128xf32>,
    return
  }
  func.func @transform_0(%arg0: i32, %arg1: i32) -> (i32, i32) {
    %c0_i32 = arith.constant 0 : i32
    %c0_i32_0 = arith.constant 0 : i32
    return %arg0, %c0_i32 : i32, i32
  }
  func.func @transform_1(%arg0: i32, %arg1: i32) -> (i32, i32) {
    %c0_i32 = arith.constant 0 : i32
    %c0_i32_0 = arith.constant 0 : i32
    %c0_i32_1 = arith.constant 0 : i32
    return %c0_i32, %c0_i32_0 : i32, i32
  }
  func.func @transform_2(%arg0: i32, %arg1: i32) -> (i32, i32) {
    %c0_i32 = arith.constant 0 : i32
    %c0_i32_0 = arith.constant 0 : i32
    %c0_i32_1 = arith.constant 0 : i32
    return %c0_i32, %c0_i32_0 : i32, i32
  }
  func.func @transform_3(%arg0: i32, %arg1: i32) -> (i32, i32) {
    %c0_i32 = arith.constant 0 : i32
    %c0_i32_0 = arith.constant 0 : i32
    return %c0_i32, %arg1 : i32, i32
  }
  func.func @transform_4(%arg0: i32, %arg1: i32) -> (i32, i32) {
    %c0_i32 = arith.constant 0 : i32
    %c0_i32_0 = arith.constant 0 : i32
    return %c0_i32, %arg1 : i32, i32
  }
  func.func @transform_5(%arg0: i32, %arg1: i32) -> (i32, i32) {
    %c0_i32 = arith.constant 0 : i32
    return %arg0, %arg1 : i32, i32
  }
}

</mosaic_0001>

<llo_original>
// kernel: tpu_custom_call.1
$region0: #{tpu_custom_call.1}
  #allocation0 [shape = 'u32[]', space=smem, size = 0x4, offset = 0x4, fixed_abs, tag = 'smem constant byte address 0x4 - core index']
  #allocation1 [shape = 'u32[144,128]{1,0:T(1,128)}', space=vmem, size = 0x12000, scoped, tag = 'internal scratch']
  #allocation2 [shape = 'bf16[128,128]{1,0:T(16,128)(2,1)}', space=vmem, size = 0x8000, scoped, tag = 'scratch operand']
  %s0 = inlined_call_operand.hbm [shape: f32[128,128], index: 0, kind: input, shape index: {}]
  %s1 = inlined_call_operand.vmem [shape: f32[1,128], index: 1, kind: input, shape index: {}]
  %s2 = inlined_call_operand.vmem [shape: f32[1,128], index: 2, kind: input, shape index: {}]
  %s3 = inlined_call_operand.hbm [shape: bf16[128,128], index: 3, kind: input, shape index: {}]
  %s4 = inlined_call_operand.vmem [shape: f32[1,128], index: 4, kind: input, shape index: {}]
  %s5 = inlined_call_operand.hbm [shape: f32[128,128], index: 5, kind: output, shape index: {}]
  %s6 = sld [smem:[#allocation0]]
  $region42: #{tpu_custom_call.1} parent=0
    _
  %s8 = ssub.s32 1, %s6
  %s9 = scalar_select 0, %s8, %s6
  $region1: #{tpu_custom_call.1} parent=0
    #allocation3 [shape = 'u8[65536]{0}', space=vmem, size = 0x10000, scoped, tag = 'input window, operand 0, single buffered']
    #allocation4 [shape = 's32[1]{0}', space=sflag, size = 0x4, scoped, tag = 'scoped memory for tpu_custom_call.1']
    #allocation5 [shape = 's32[1]{0}', space=sflag, size = 0x4, scoped, tag = 'scoped memory for tpu_custom_call.1']
    #allocation6 [shape = 'u8[32768]{0}', space=vmem, size = 0x8000, scoped, tag = 'input window, operand 3, single buffered']
    #allocation7 [shape = 's32[1]{0}', space=sflag, size = 0x4, scoped, tag = 'scoped memory for tpu_custom_call.1']
    #allocation8 [shape = 'u8[65536]{0}', space=vmem, size = 0x10000, scoped, tag = 'output window, operand 0, single buffered']
    %10 = vsyncpa [#allocation4], 0
    %11 = vsyncpa [#allocation7], 0
    %12 = vsyncpa [#allocation5], 0
    // Predicated region
    $region2: #{tpu_custom_call.1} parent=1 // pred_check
      _
    $region3: #{tpu_custom_call.1} parent=1 // pred_check_branch
      %14 = sbr.rel (0) target = $region5
    $region4: #{tpu_custom_call.1} parent=1 // pred_region
      %s16 = ssub.s32 2048, 2048
      %17 = vsyncadd [#allocation4], %s16
      %s18 = sshll.u32 [#allocation3], 4
      %s19 = int_to_ptr.vmem [resolvable:$true] %s18
      %24 = dma.hbm_to_vmem [thread:$0]  %s0, 2048, %s19, [#allocation4], 128, 128, 8
    $region5: #{tpu_custom_call.1} parent=1 // pred_fallthru
      _
    // Predicated region
    $region6: #{tpu_custom_call.1} parent=1 // pred_check
      _
    $region7: #{tpu_custom_call.1} parent=1 // pred_check_branch
      %26 = sbr.rel (0) target = $region9
    $region8: #{tpu_custom_call.1} parent=1 // pred_region
      _
    $region9: #{tpu_custom_call.1} parent=1 // pred_fallthru
      _
    // Predicated region
    $region10: #{tpu_custom_call.1} parent=1 // pred_check
      _
    $region11: #{tpu_custom_call.1} parent=1 // pred_check_branch
      %28 = sbr.rel (0) target = $region13
    $region12: #{tpu_custom_call.1} parent=1 // pred_region
      _
    $region13: #{tpu_custom_call.1} parent=1 // pred_fallthru
      _
    // Predicated region
    $region14: #{tpu_custom_call.1} parent=1 // pred_check
      _
    $region15: #{tpu_custom_call.1} parent=1 // pred_check_branch
      %30 = sbr.rel (0) target = $region17
    $region16: #{tpu_custom_call.1} parent=1 // pred_region
      %s32 = ssub.s32 1024, 1024
      %33 = vsyncadd [#allocation7], %s32
      %s34 = sshll.u32 [#allocation6], 4
      %s35 = int_to_ptr.vmem [resolvable:$true] %s34
      %40 = dma.hbm_to_vmem [thread:$0]  %s3, 1024, %s35, [#allocation7], 64, 64, 4
    $region17: #{tpu_custom_call.1} parent=1 // pred_fallthru
      _
    // Predicated region
    $region18: #{tpu_custom_call.1} parent=1 // pred_check
      _
    $region19: #{tpu_custom_call.1} parent=1 // pred_check_branch
      %42 = sbr.rel (0) target = $region21
    $region20: #{tpu_custom_call.1} parent=1 // pred_region
      _
    $region21: #{tpu_custom_call.1} parent=1 // pred_fallthru
      _
    // Predicated region
    $region22: #{tpu_custom_call.1} parent=1 // pred_check
      _
    $region23: #{tpu_custom_call.1} parent=1 // pred_check_branch
      %44 = sbr.rel (0) target = $region25
    $region24: #{tpu_custom_call.1} parent=1 // pred_region
      %45 = dma.done [#allocation4], 2048
    $region25: #{tpu_custom_call.1} parent=1 // pred_fallthru
      _
    // Predicated region
    $region26: #{tpu_custom_call.1} parent=1 // pred_check
      _
    $region27: #{tpu_custom_call.1} parent=1 // pred_check_branch
      %47 = sbr.rel (0) target = $region29
    $region28: #{tpu_custom_call.1} parent=1 // pred_region
      %48 = dma.done [#allocation7], 1024
    $region29: #{tpu_custom_call.1} parent=1 // pred_fallthru
      _
    %p50 = scmp.eq.s32.totalorder 0, 0
    // Predicated region
    $region30: #{tpu_custom_call.1} parent=1 // pred_check
      %p51 = pneg %p50
    $region31: #{tpu_custom_call.1} parent=1 // pred_check_branch
      %53 = sbr.rel (%p51) target = $region33
    $region32: #{tpu_custom_call.1} parent=1 // pred_region
      %v54 = vld [vmem:[#allocation3] sm:$0xff]
      %v55 = vld [vmem:[#allocation3 + $0x8] sm:$0xff]
      %v56 = vld [vmem:[#allocation3 + $0x10] sm:$0xff]
      %v57 = vld [vmem:[#allocation3 + $0x18] sm:$0xff]
      %v58 = vld [vmem:[#allocation3 + $0x20] sm:$0xff]
      %v59 = vld [vmem:[#allocation3 + $0x28] sm:$0xff]
      %v60 = vld [vmem:[#allocation3 + $0x30] sm:$0xff]
      %v61 = vld [vmem:[#allocation3 + $0x38] sm:$0xff]
      %v62 = vld [vmem:[#allocation3 + $0x40] sm:$0xff]
      %v63 = vld [vmem:[#allocation3 + $0x48] sm:$0xff]
      %v64 = vld [vmem:[#allocation3 + $0x50] sm:$0xff]
      %v65 = vld [vmem:[#allocation3 + $0x58] sm:$0xff]
      %v66 = vld [vmem:[#allocation3 + $0x60] sm:$0xff]
      %v67 = vld [vmem:[#allocation3 + $0x68] sm:$0xff]
      %v68 = vld [vmem:[#allocation3 + $0x70] sm:$0xff]
      %v69 = vld [vmem:[#allocation3 + $0x78] sm:$0xff]
      %v70 = vlaneseq
      %v71 = vand.u32 %v70, 127
      %vm72 = vcmp.lt.s32.totalorder %v71, 32
      %v73 = vsel %vm72, 1, 0
      %v74 = vcvt.s32.f32 %v73
      %v75 = vmul.f32 %v54, %v74
      %v76 = vmul.f32 %v55, %v74
      %v77 = vmul.f32 %v56, %v74
      %v78 = vmul.f32 %v57, %v74
      %v79 = vmul.f32 %v58, %v74
      %v80 = vmul.f32 %v59, %v74
      %v81 = vmul.f32 %v60, %v74
      %v82 = vmul.f32 %v61, %v74
      %v83 = vmul.f32 %v62, %v74
      %v84 = vmul.f32 %v63, %v74
      %v85 = vmul.f32 %v64, %v74
      %v86 = vmul.f32 %v65, %v74
      %v87 = vmul.f32 %v66, %v74
      %v88 = vmul.f32 %v67, %v74
      %v89 = vmul.f32 %v68, %v74
      %v90 = vmul.f32 %v69, %v74
      %91 = vadd.xlane.f32.xlu0 %v75
      %v92 = vpop.xlane.xlu0 %91
      %93 = vadd.xlane.f32.xlu0 %v76
      %v94 = vpop.xlane.xlu0 %93
      %95 = vadd.xlane.f32.xlu0 %v77
      %v96 = vpop.xlane.xlu0 %95
      %97 = vadd.xlane.f32.xlu0 %v78
      %v98 = vpop.xlane.xlu0 %97
      %99 = vadd.xlane.f32.xlu0 %v79
      %v100 = vpop.xlane.xlu0 %99
      %101 = vadd.xlane.f32.xlu0 %v80
      %v102 = vpop.xlane.xlu0 %101
      %103 = vadd.xlane.f32.xlu0 %v81
      %v104 = vpop.xlane.xlu0 %103
      %105 = vadd.xlane.f32.xlu0 %v82
      %v106 = vpop.xlane.xlu0 %105
      %107 = vadd.xlane.f32.xlu0 %v83
      %v108 = vpop.xlane.xlu0 %107
      %109 = vadd.xlane.f32.xlu0 %v84
      %v110 = vpop.xlane.xlu0 %109
      %111 = vadd.xlane.f32.xlu0 %v85
      %v112 = vpop.xlane.xlu0 %111
      %113 = vadd.xlane.f32.xlu0 %v86
      %v114 = vpop.xlane.xlu0 %113
      %115 = vadd.xlane.f32.xlu0 %v87
      %v116 = vpop.xlane.xlu0 %115
      %117 = vadd.xlane.f32.xlu0 %v88
      %v118 = vpop.xlane.xlu0 %117
      %119 = vadd.xlane.f32.xlu0 %v89
      %v120 = vpop.xlane.xlu0 %119
      %121 = vadd.xlane.f32.xlu0 %v90
      %v122 = vpop.xlane.xlu0 %121
      %v123 = vmul.f32 %v92, 0.03125
      %v124 = vmul.f32 %v94, 0.03125
      %v125 = vmul.f32 %v96, 0.03125
      %v126 = vmul.f32 %v98, 0.03125
      %v127 = vmul.f32 %v100, 0.03125
      %v128 = vmul.f32 %v102, 0.03125
      %v129 = vmul.f32 %v104, 0.03125
      %v130 = vmul.f32 %v106, 0.03125
      %v131 = vmul.f32 %v108, 0.03125
      %v132 = vmul.f32 %v110, 0.03125
      %v133 = vmul.f32 %v112, 0.03125
      %v134 = vmul.f32 %v114, 0.03125
      %v135 = vmul.f32 %v116, 0.03125
      %v136 = vmul.f32 %v118, 0.03125
      %v137 = vmul.f32 %v120, 0.03125
      %v138 = vmul.f32 %v122, 0.03125
      %v139 = vsub.f32 %v75, %v123
      %v140 = vsub.f32 %v76, %v124
      %v141 = vsub.f32 %v77, %v125
      %v142 = vsub.f32 %v78, %v126
      %v143 = vsub.f32 %v79, %v127
      %v144 = vsub.f32 %v80, %v128
      %v145 = vsub.f32 %v81, %v129
      %v146 = vsub.f32 %v82, %v130
      %v147 = vsub.f32 %v83, %v131
      %v148 = vsub.f32 %v84, %v132
      %v149 = vsub.f32 %v85, %v133
      %v150 = vsub.f32 %v86, %v134
      %v151 = vsub.f32 %v87, %v135
      %v152 = vsub.f32 %v88, %v136
      %v153 = vsub.f32 %v89, %v137
      %v154 = vsub.f32 %v90, %v138
      %v155 = vmul.f32 %v139, %v74
      %v156 = vmul.f32 %v140, %v74
      %v157 = vmul.f32 %v141, %v74
      %v158 = vmul.f32 %v142, %v74
      %v159 = vmul.f32 %v143, %v74
      %v160 = vmul.f32 %v144, %v74
      %v161 = vmul.f32 %v145, %v74
      %v162 = vmul.f32 %v146, %v74
      %v163 = vmul.f32 %v147, %v74
      %v164 = vmul.f32 %v148, %v74
      %v165 = vmul.f32 %v149, %v74
      %v166 = vmul.f32 %v150, %v74
      %v167 = vmul.f32 %v151, %v74
      %v168 = vmul.f32 %v152, %v74
      %v169 = vmul.f32 %v153, %v74
      %v170 = vmul.f32 %v154, %v74
      %v171 = vmul.f32 %v155, %v155
      %v172 = vmul.f32 %v156, %v156
      %v173 = vmul.f32 %v157, %v157
      %v174 = vmul.f32 %v158, %v158
      %v175 = vmul.f32 %v159, %v159
      %v176 = vmul.f32 %v160, %v160
      %v177 = vmul.f32 %v161, %v161
      %v178 = vmul.f32 %v162, %v162
      %v179 = vmul.f32 %v163, %v163
      %v180 = vmul.f32 %v164, %v164
      %v181 = vmul.f32 %v165, %v165
      %v182 = vmul.f32 %v166, %v166
      %v183 = vmul.f32 %v167, %v167
      %v184 = vmul.f32 %v168, %v168
      %v185 = vmul.f32 %v169, %v169
      %v186 = vmul.f32 %v170, %v170
      %187 = vadd.xlane.f32.xlu0 %v171
      %v188 = vpop.xlane.xlu0 %187
      %189 = vadd.xlane.f32.xlu0 %v172
      %v190 = vpop.xlane.xlu0 %189
      %191 = vadd.xlane.f32.xlu0 %v173
      %v192 = vpop.xlane.xlu0 %191
      %193 = vadd.xlane.f32.xlu0 %v174
      %v194 = vpop.xlane.xlu0 %193
      %195 = vadd.xlane.f32.xlu0 %v175
      %v196 = vpop.xlane.xlu0 %195
      %197 = vadd.xlane.f32.xlu0 %v176
      %v198 = vpop.xlane.xlu0 %197
      %199 = vadd.xlane.f32.xlu0 %v177
      %v200 = vpop.xlane.xlu0 %199
      %201 = vadd.xlane.f32.xlu0 %v178
      %v202 = vpop.xlane.xlu0 %201
      %203 = vadd.xlane.f32.xlu0 %v179
      %v204 = vpop.xlane.xlu0 %203
      %205 = vadd.xlane.f32.xlu0 %v180
      %v206 = vpop.xlane.xlu0 %205
      %207 = vadd.xlane.f32.xlu0 %v181
      %v208 = vpop.xlane.xlu0 %207
      %209 = vadd.xlane.f32.xlu0 %v182
      %v210 = vpop.xlane.xlu0 %209
      %211 = vadd.xlane.f32.xlu0 %v183
      %v212 = vpop.xlane.xlu0 %211
      %213 = vadd.xlane.f32.xlu0 %v184
      %v214 = vpop.xlane.xlu0 %213
      %215 = vadd.xlane.f32.xlu0 %v185
      %v216 = vpop.xlane.xlu0 %215
      %217 = vadd.xlane.f32.xlu0 %v186
      %v218 = vpop.xlane.xlu0 %217
      %v219 = vmul.f32 %v188, 0.03125
      %v220 = vmul.f32 %v190, 0.03125
      %v221 = vmul.f32 %v192, 0.03125
      %v222 = vmul.f32 %v194, 0.03125
      %v223 = vmul.f32 %v196, 0.03125
      %v224 = vmul.f32 %v198, 0.03125
      %v225 = vmul.f32 %v200, 0.03125
      %v226 = vmul.f32 %v202, 0.03125
      %v227 = vmul.f32 %v204, 0.03125
      %v228 = vmul.f32 %v206, 0.03125
      %v229 = vmul.f32 %v208, 0.03125
      %v230 = vmul.f32 %v210, 0.03125
      %v231 = vmul.f32 %v212, 0.03125
      %v232 = vmul.f32 %v214, 0.03125
      %v233 = vmul.f32 %v216, 0.03125
      %v234 = vmul.f32 %v218, 0.03125
      %v235 = vadd.f32 %v219, 1e-05
      %v236 = vadd.f32 %v220, 1e-05
      %v237 = vadd.f32 %v221, 1e-05
      %v238 = vadd.f32 %v222, 1e-05
      %v239 = vadd.f32 %v223, 1e-05
      %v240 = vadd.f32 %v224, 1e-05
      %v241 = vadd.f32 %v225, 1e-05
      %v242 = vadd.f32 %v226, 1e-05
      %v243 = vadd.f32 %v227, 1e-05
      %v244 = vadd.f32 %v228, 1e-05
      %v245 = vadd.f32 %v229, 1e-05
      %v246 = vadd.f32 %v230, 1e-05
      %v247 = vadd.f32 %v231, 1e-05
      %v248 = vadd.f32 %v232, 1e-05
      %v249 = vadd.f32 %v233, 1e-05
      %v250 = vadd.f32 %v234, 1e-05
      %v251 = vrsqrt.pop %v235
      %v252 = vrsqrt.pop %v236
      %v253 = vrsqrt.pop %v237
      %v254 = vrsqrt.pop %v238
      %v255 = vrsqrt.pop %v239
      %v256 = vrsqrt.pop %v240
      %v257 = vrsqrt.pop %v241
      %v258 = vrsqrt.pop %v242
      %v259 = vrsqrt.pop %v243
      %v260 = vrsqrt.pop %v244
      %v261 = vrsqrt.pop %v245
      %v262 = vrsqrt.pop %v246
      %v263 = vrsqrt.pop %v247
      %v264 = vrsqrt.pop %v248
      %v265 = vrsqrt.pop %v249
      %v266 = vrsqrt.pop %v250
      %v267 = vld [vmem:[%s1] sm:$0x1]
      %v269 = vlaneseq
      %v270 = vshrl.u32 %v269, 7
      %v271 = vsub.s32 0, %v270
      %v272 = vrot.slane %v267, %v271
      %v274 = vmul.f32 %v251, %v272
      %v275 = vmul.f32 %v252, %v272
      %v276 = vmul.f32 %v253, %v272
      %v277 = vmul.f32 %v254, %v272
      %v278 = vmul.f32 %v255, %v272
      %v279 = vmul.f32 %v256, %v272
      %v280 = vmul.f32 %v257, %v272
      %v281 = vmul.f32 %v258, %v272
      %v282 = vmul.f32 %v259, %v272
      %v283 = vmul.f32 %v260, %v272
      %v284 = vmul.f32 %v261, %v272
      %v285 = vmul.f32 %v262, %v272
      %v286 = vmul.f32 %v263, %v272
      %v287 = vmul.f32 %v264, %v272
      %v288 = vmul.f32 %v265, %v272
      %v289 = vmul.f32 %v266, %v272
      %v290 = vmul.f32 %v155, %v274
      %v291 = vmul.f32 %v156, %v275
      %v292 = vmul.f32 %v157, %v276
      %v293 = vmul.f32 %v158, %v277
      %v294 = vmul.f32 %v159, %v278
      %v295 = vmul.f32 %v160, %v279
      %v296 = vmul.f32 %v161, %v280
      %v297 = vmul.f32 %v162, %v281
      %v298 = vmul.f32 %v163, %v282
      %v299 = vmul.f32 %v164, %v283
      %v300 = vmul.f32 %v165, %v284
      %v301 = vmul.f32 %v166, %v285
      %v302 = vmul.f32 %v167, %v286
      %v303 = vmul.f32 %v168, %v287
      %v304 = vmul.f32 %v169, %v288
      %v305 = vmul.f32 %v170, %v289
      %v306 = vld [vmem:[%s2] sm:$0x1]
      %v308 = vlaneseq
      %v309 = vshrl.u32 %v308, 7
      %v310 = vsub.s32 0, %v309
      %v311 = vrot.slane %v306, %v310
      %v313 = vadd.f32 %v290, %v311
      %v314 = vadd.f32 %v291, %v311
      %v315 = vadd.f32 %v292, %v311
      %v316 = vadd.f32 %v293, %v311
      %v317 = vadd.f32 %v294, %v311
      %v318 = vadd.f32 %v295, %v311
      %v319 = vadd.f32 %v296, %v311
      %v320 = vadd.f32 %v297, %v311
      %v321 = vadd.f32 %v298, %v311
      %v322 = vadd.f32 %v299, %v311
      %v323 = vadd.f32 %v300, %v311
      %v324 = vadd.f32 %v301, %v311
      %v325 = vadd.f32 %v302, %v311
      %v326 = vadd.f32 %v303, %v311
      %v327 = vadd.f32 %v304, %v311
      %v328 = vadd.f32 %v305, %v311
      %v329 = vpack.c.bf16 %v314, %v313
      %v330 = vpack.c.bf16 %v316, %v315
      %v331 = vpack.c.bf16 %v318, %v317
      %v332 = vpack.c.bf16 %v320, %v319
      %v333 = vpack.c.bf16 %v322, %v321
      %v334 = vpack.c.bf16 %v324, %v323
      %v335 = vpack.c.bf16 %v326, %v325
      %v336 = vpack.c.bf16 %v328, %v327
      %337 = vst [vmem:[#allocation2] sm:$0xff] %v329
      %338 = vst [vmem:[#allocation2 + $0x8] sm:$0xff] %v330
      %339 = vst [vmem:[#allocation2 + $0x10] sm:$0xff] %v331
      %340 = vst [vmem:[#allocation2 + $0x18] sm:$0xff] %v332
      %341 = vst [vmem:[#allocation2 + $0x20] sm:$0xff] %v333
      %342 = vst [vmem:[#allocation2 + $0x28] sm:$0xff] %v334
      %343 = vst [vmem:[#allocation2 + $0x30] sm:$0xff] %v335
      %344 = vst [vmem:[#allocation2 + $0x38] sm:$0xff] %v336
    $region33: #{tpu_custom_call.1} parent=1 // pred_fallthru
      _
    %v345 = vld [vmem:[#allocation2] sm:$0xff]
    %v346 = vld [vmem:[#allocation2 + $0x8] sm:$0xff]
    %v347 = vld [vmem:[#allocation2 + $0x10] sm:$0xff]
    %v348 = vld [vmem:[#allocation2 + $0x18] sm:$0xff]
    %v349 = vld [vmem:[#allocation2 + $0x20] sm:$0xff]
    %v350 = vld [vmem:[#allocation2 + $0x28] sm:$0xff]
    %v351 = vld [vmem:[#allocation2 + $0x30] sm:$0xff]
    %v352 = vld [vmem:[#allocation2 + $0x38] sm:$0xff]
    %v353 = vld [vmem:[#allocation6] sm:$0xf]
    %v354 = vld [vmem:[#allocation6 + $0x4] sm:$0xf]
    %v355 = vld [vmem:[#allocation6 + $0x8] sm:$0xf]
    %v356 = vld [vmem:[#allocation6 + $0xc] sm:$0xf]
    %v357 = vld [vmem:[#allocation6 + $0x10] sm:$0xf]
    %v358 = vld [vmem:[#allocation6 + $0x14] sm:$0xf]
    %v359 = vld [vmem:[#allocation6 + $0x18] sm:$0xf]
    %v360 = vld [vmem:[#allocation6 + $0x1c] sm:$0xf]
    %v361 = vld [vmem:[#allocation6 + $0x20] sm:$0xf]
    %v362 = vld [vmem:[#allocation6 + $0x24] sm:$0xf]
    %v363 = vld [vmem:[#allocation6 + $0x28] sm:$0xf]
    %v364 = vld [vmem:[#allocation6 + $0x2c] sm:$0xf]
    %v365 = vld [vmem:[#allocation6 + $0x30] sm:$0xf]
    %v366 = vld [vmem:[#allocation6 + $0x34] sm:$0xf]
    %v367 = vld [vmem:[#allocation6 + $0x38] sm:$0xf]
    %v368 = vld [vmem:[#allocation6 + $0x3c] sm:$0xf]
    %v369 = vld [vmem:[%s4] sm:$0x1]
    %v371 = vlaneseq
    %v372 = vshrl.u32 %v371, 7
    %v373 = vsub.s32 0, %v372
    %v374 = vrot.slane %v369, %v373
    %v392 = vunpack.c.l.b16 %v353
    %v393 = vunpack.c.l.b16 %v354
    %v394 = vunpack.c.l.b16 %v355
    %v395 = vunpack.c.l.b16 %v356
    %v396 = vunpack.c.l.b16 %v357
    %v397 = vunpack.c.l.b16 %v358
    %v398 = vunpack.c.l.b16 %v359
    %v399 = vunpack.c.l.b16 %v360
    %v400 = vunpack.c.l.b16 %v361
    %v401 = vunpack.c.l.b16 %v362
    %v402 = vunpack.c.l.b16 %v363
    %v403 = vunpack.c.l.b16 %v364
    %v404 = vunpack.c.l.b16 %v365
    %v405 = vunpack.c.l.b16 %v366
    %v406 = vunpack.c.l.b16 %v367
    %v407 = vunpack.c.l.b16 %v368
    %v408 = vpack.c.b16 %v393, %v392
    %v409 = vpack.c.b16 %v395, %v394
    %v410 = vpack.c.b16 %v397, %v396
    %v411 = vpack.c.b16 %v399, %v398
    %v412 = vpack.c.b16 %v401, %v400
    %v413 = vpack.c.b16 %v403, %v402
    %v414 = vpack.c.b16 %v405, %v404
    %v415 = vpack.c.b16 %v407, %v406
    %424 = vmatprep.subr.bf16.mxu0 0
    %425 = vmatpush1.bf16.msra.mxu0 %v408
    %426 = vmatprep.subr.bf16.mxu0 0
    %427 = vmatpush1.bf16.msra.mxu0 %v409
    %428 = vmatprep.subr.bf16.mxu0 0
    %429 = vmatpush1.bf16.msra.mxu0 %v410
    %430 = vmatprep.subr.bf16.mxu0 0
    %431 = vmatpush1.bf16.msra.mxu0 %v411
    %432 = vmatprep.subr.bf16.mxu0 0
    %433 = vmatpush1.bf16.msra.mxu0 %v412
    %434 = vmatprep.subr.bf16.mxu0 0
    %435 = vmatpush1.bf16.msra.mxu0 %v413
    %436 = vmatprep.subr.bf16.mxu0 0
    %437 = vmatpush1.bf16.msra.mxu0 %v414
    %438 = vmatprep.subr.bf16.mxu0 0
    %439 = vmatpush1.bf16.msra.mxu0 %v415
    %440 = vmatprep.subr.bf16.mxu0 0
    %441 = vmatpush1.bf16.msra.mxu0 0
    %442 = vmatprep.subr.bf16.mxu0 0
    %443 = vmatpush1.bf16.msra.mxu0 0
    %444 = vmatprep.subr.bf16.mxu0 0
    %445 = vmatpush1.bf16.msra.mxu0 0
    %446 = vmatprep.subr.bf16.mxu0 0
    %447 = vmatpush1.bf16.msra.mxu0 0
    %448 = vmatprep.subr.bf16.mxu0 0
    %449 = vmatpush1.bf16.msra.mxu0 0
    %450 = vmatprep.subr.bf16.mxu0 0
    %451 = vmatpush1.bf16.msra.mxu0 0
    %452 = vmatprep.subr.bf16.mxu0 0
    %453 = vmatpush1.bf16.msra.mxu0 0
    %454 = vmatprep.subr.bf16.mxu0 0
    %455 = vmatpush1.bf16.msra.mxu0 0
    %456 = vmatprep.mubr.bf16.mxu0 0
    %457 = vmatmul.mubr.bf16.gmra.mrb[0].mxu0 %v345
    %v458 = vpop.f32.mrb[0].mxu0
    %v459 = vadd.f32 %v374, %v458
    %v460 = vpop.f32.mrb[0].mxu0
    %v461 = vpop.f32.mrb[0].mxu0
    %v462 = vadd.f32 %v374, %v461
    %v463 = vpop.f32.mrb[0].mxu0
    %464 = vmatprep.mubr.bf16.mxu0 0
    %465 = vmatmul.mubr.bf16.gmra.mrb[0].mxu0 %v346
    %v466 = vpop.f32.mrb[0].mxu0
    %v467 = vadd.f32 %v374, %v466
    %v468 = vpop.f32.mrb[0].mxu0
    %v469 = vpop.f32.mrb[0].mxu0
    %v470 = vadd.f32 %v374, %v469
    %v471 = vpop.f32.mrb[0].mxu0
    %472 = vmatprep.mubr.bf16.mxu0 0
    %473 = vmatmul.mubr.bf16.gmra.mrb[0].mxu0 %v347
    %v474 = vpop.f32.mrb[0].mxu0
    %v475 = vadd.f32 %v374, %v474
    %v476 = vpop.f32.mrb[0].mxu0
    %v477 = vpop.f32.mrb[0].mxu0
    %v478 = vadd.f32 %v374, %v477
    %v479 = vpop.f32.mrb[0].mxu0
    %480 = vmatprep.mubr.bf16.mxu0 0
    %481 = vmatmul.mubr.bf16.gmra.mrb[0].mxu0 %v348
    %v482 = vpop.f32.mrb[0].mxu0
    %v483 = vadd.f32 %v374, %v482
    %v484 = vpop.f32.mrb[0].mxu0
    %v485 = vpop.f32.mrb[0].mxu0
    %v486 = vadd.f32 %v374, %v485
    %v487 = vpop.f32.mrb[0].mxu0
    %488 = vmatprep.mubr.bf16.mxu0 0
    %489 = vmatmul.mubr.bf16.gmra.mrb[0].mxu0 %v349
    %v490 = vpop.f32.mrb[0].mxu0
    %v491 = vadd.f32 %v374, %v490
    %v492 = vpop.f32.mrb[0].mxu0
    %v493 = vpop.f32.mrb[0].mxu0
    %v494 = vadd.f32 %v374, %v493
    %v495 = vpop.f32.mrb[0].mxu0
    %496 = vmatprep.mubr.bf16.mxu0 0
    %497 = vmatmul.mubr.bf16.gmra.mrb[0].mxu0 %v350
    %v498 = vpop.f32.mrb[0].mxu0
    %v499 = vadd.f32 %v374, %v498
    %v500 = vpop.f32.mrb[0].mxu0
    %v501 = vpop.f32.mrb[0].mxu0
    %v502 = vadd.f32 %v374, %v501
    %v503 = vpop.f32.mrb[0].mxu0
    %504 = vmatprep.mubr.bf16.mxu0 0
    %505 = vmatmul.mubr.bf16.gmra.mrb[0].mxu0 %v351
    %v506 = vpop.f32.mrb[0].mxu0
    %v507 = vadd.f32 %v374, %v506
    %v508 = vpop.f32.mrb[0].mxu0
    %v509 = vpop.f32.mrb[0].mxu0
    %v510 = vadd.f32 %v374, %v509
    %v511 = vpop.f32.mrb[0].mxu0
    %512 = vmatprep.mubr.bf16.mxu0 0
    %513 = vmatmul.mubr.bf16.gmra.mrb[0].mxu0 %v352
    %v514 = vpop.f32.mrb[0].mxu0
    %v515 = vadd.f32 %v374, %v514
    %v516 = vpop.f32.mrb[0].mxu0
    %v517 = vpop.f32.mrb[0].mxu0
    %v518 = vadd.f32 %v374, %v517
    %v519 = vpop.f32.mrb[0].mxu0
    %520 = vdwg.mxu0
    %521 = vst [vmem:[#allocation8] sm:$0xff] %v459
    %522 = vst [vmem:[#allocation8 + $0x8] sm:$0xff] %v462
    %523 = vst [vmem:[#allocation8 + $0x10] sm:$0xff] %v467
    %524 = vst [vmem:[#allocation8 + $0x18] sm:$0xff] %v470
    %525 = vst [vmem:[#allocation8 + $0x20] sm:$0xff] %v475
    %526 = vst [vmem:[#allocation8 + $0x28] sm:$0xff] %v478
    %527 = vst [vmem:[#allocation8 + $0x30] sm:$0xff] %v483
    %528 = vst [vmem:[#allocation8 + $0x38] sm:$0xff] %v486
    %529 = vst [vmem:[#allocation8 + $0x40] sm:$0xff] %v491
    %530 = vst [vmem:[#allocation8 + $0x48] sm:$0xff] %v494
    %531 = vst [vmem:[#allocation8 + $0x50] sm:$0xff] %v499
    %532 = vst [vmem:[#allocation8 + $0x58] sm:$0xff] %v502
    %533 = vst [vmem:[#allocation8 + $0x60] sm:$0xff] %v507
    %534 = vst [vmem:[#allocation8 + $0x68] sm:$0xff] %v510
    %535 = vst [vmem:[#allocation8 + $0x70] sm:$0xff] %v515
    %536 = vst [vmem:[#allocation8 + $0x78] sm:$0xff] %v518
    // Predicated region
    $region34: #{tpu_custom_call.1} parent=1 // pred_check
      _
    $region35: #{tpu_custom_call.1} parent=1 // pred_check_branch
      %538 = sbr.rel (0) target = $region37
    $region36: #{tpu_custom_call.1} parent=1 // pred_region
      %s540 = ssub.s32 2048, 2048
      %541 = vsyncadd [#allocation5], %s540
      %s542 = sshll.u32 [#allocation8], 4
      %s543 = int_to_ptr.vmem [resolvable:$true] %s542
      %548 = dma.vmem_to_hbm [thread:$0]  %s543, 2048, %s5, [#allocation5], 128, 128, 8
    $region37: #{tpu_custom_call.1} parent=1 // pred_fallthru
      _
    // Predicated region
    $region38: #{tpu_custom_call.1} parent=1 // pred_check
      _
    $region39: #{tpu_custom_call.1} parent=1 // pred_check_branch
      %550 = sbr.rel (0) target = $region41
    $region40: #{tpu_custom_call.1} parent=1 // pred_region
      %551 = dma.done [#allocation5], 2048
    $region41: #{tpu_custom_call.1} parent=1 // pred_fallthru
      _
    %552 = vsyncpa [#allocation4], 1
    %553 = vsyncpa [#allocation7], 1
    %554 = vsyncpa [#allocation5], 1

</llo_original>
